<compile_context>
chip_gen: v7x
topology: tpu7x:2x2x1
jax: 0.10.0
libtpu: 0.0.40
codegen_flags: <defaults>
</compile_context>

<pallas_src>
import functools

import jax
import jax.numpy as jnp
from jax.experimental import pallas as pl
from jax.experimental.pallas import tpu as pltpu

BN_EPS = 1e-5
_VMEM_CAP = 48 * 1024 * 1024


def _round_up(x, m):
    return (x + m - 1) // m * m


def _cdiv(a, b):
    return (a + b - 1) // b


# --------------------------------------------------------------------------
# Kernels
# --------------------------------------------------------------------------
def _fused_bn_linear_kernel(x_ref, gamma_ref, beta_ref, w_ref, b_ref, o_ref):
    """fc_arch 'A', x fully resident in VMEM: batch stats -> BN -> Linear."""
    x = x_ref[...].astype(jnp.float32)                       # (batch, in_dim)
    mean = jnp.mean(x, axis=0, keepdims=True)                # (1, in_dim)
    xc = x - mean
    var = jnp.mean(xc * xc, axis=0, keepdims=True)           # two-pass variance
    scale = gamma_ref[...] * jax.lax.rsqrt(var + BN_EPS)
    x_bn = (xc * scale + beta_ref[...]).astype(w_ref.dtype)
    y = jnp.dot(x_bn, w_ref[...], preferred_element_type=jnp.float32)
    o_ref[...] = (y + b_ref[...]).astype(o_ref.dtype)


def _bn_stats_kernel(x_ref, sum_ref, sumsq_ref, *, tb, true_batch, n_inner):
    """Streaming per-feature sum(x) and sum(x^2).

    Grid is (2, n_inner): the leading axis is 'parallel' (one slice per v7x
    TensorCore); the inner axis streams batch tiles.  Tail rows and duplicated
    (clamped) tiles are zeroed via a row mask built from the *unclamped* tile
    index, so they contribute nothing to the sums.
    """
    c = pl.program_id(0)
    j = pl.program_id(1)

    @pl.when(j == 0)
    def _():
        sum_ref[...] = jnp.zeros_like(sum_ref)
        sumsq_ref[...] = jnp.zeros_like(sumsq_ref)

    row0 = (c * n_inner + j) * tb
    rows = jax.lax.broadcasted_iota(jnp.int32, (tb, 1), 0) + row0
    valid = rows < true_batch                                 # (tb, 1)
    x = jnp.where(valid, x_ref[...].astype(jnp.float32), 0.0)
    sum_ref[0:1, :] += jnp.sum(x, axis=0, keepdims=True)
    sumsq_ref[0:1, :] += jnp.sum(x * x, axis=0, keepdims=True)


def _linear_kernel(*refs, apply_bn):
    """y = x @ W + b for one batch tile; W / bias (and scale/shift) resident.

    apply_bn=True normalises the x tile with per-feature scale/shift in f32
    before casting to the MXU dtype (no W_eff materialisation in XLA).
    """
    if apply_bn:
        x_ref, scale_ref, shift_ref, w_ref, b_ref, o_ref = refs
        x = x_ref[...].astype(jnp.float32) * scale_ref[...] + shift_ref[...]
    else:
        x_ref, w_ref, b_ref, o_ref = refs
        x = x_ref[...]
    y = jnp.dot(x.astype(w_ref.dtype), w_ref[...],
                preferred_element_type=jnp.float32)
    o_ref[...] = (y + b_ref[...]).astype(o_ref.dtype)


# --------------------------------------------------------------------------
# Wrapper
# --------------------------------------------------------------------------
@functools.partial(
    jax.jit, static_argnames=("fc_arch", "out_dim", "_force_two_pass"))
def text_swem_forward(x, params, fc_arch="A", out_dim=None,
                      _force_two_pass=False):
    """x: (batch, in_dim) sentence embedding. Returns (batch, out_dim)."""
    if fc_arch not in ("A", "B"):
        raise ValueError(f"unknown fc_arch {fc_arch!r}")
    batch, in_dim = x.shape
    w = params["weight_t"]            # (in_dim, out_p)  pre-padded, compute dtype
    b = params["bias"]                # (1, out_p)       pre-padded, f32
    out_p = w.shape[1]
    if out_dim is None:
        out_dim = out_p

    xdt = jnp.dtype(x.dtype).itemsize
    cdt = jnp.dtype(w.dtype).itemsize
    in_lanes = _round_up(in_dim, 128)            # VMEM lane padding (estimates)
    batch8 = _round_up(batch, 8)
    w_bytes = _round_up(in_dim, 8) * out_p * cdt

    # ---- batch tiling for the streaming path ----
    if batch <= 8:
        tb = batch                               # single exact tile
    else:
        n_target = max(2, _cdiv(batch, 512))     # >=2 tiles -> megacore shards
        tb = _round_up(_cdiv(batch, n_target), 8)
    n_bt = _cdiv(batch, tb)

    def vmem_limit(need):
        return int(min(max(need + (4 << 20), 8 << 20), _VMEM_CAP))

    def linear_call(operands, apply_bn):
        in_specs = [pl.BlockSpec((tb, in_dim), lambda i: (i, 0))]      # x streams
        if apply_bn:
            in_specs += [pl.BlockSpec((1, in_dim), lambda i: (0, 0)),  # scale
                         pl.BlockSpec((1, in_dim), lambda i: (0, 0))]  # shift
        in_specs += [pl.BlockSpec((in_dim, out_p), lambda i: (0, 0)),  # W resident
                     pl.BlockSpec((1, out_p), lambda i: (0, 0))]       # bias resident
        need = (2 * tb * in_lanes * xdt          # x (double-buffered)
                + 2 * tb * out_p * xdt           # out (double-buffered)
                + 2 * w_bytes)                   # resident W buffers
        return pl.pallas_call(
            functools.partial(_linear_kernel, apply_bn=apply_bn),
            out_shape=jax.ShapeDtypeStruct((batch, out_p), x.dtype),
            grid=(n_bt,),
            in_specs=in_specs,
            out_specs=pl.BlockSpec((tb, out_p), lambda i: (i, 0)),
            compiler_params=pltpu.CompilerParams(
                dimension_semantics=("parallel",),
                vmem_limit_bytes=vmem_limit(need)),
            cost_estimate=pl.CostEstimate(
                flops=2 * batch * in_dim * out_p,
                transcendentals=0,
                bytes_accessed=batch * in_dim * xdt + w_bytes
                               + batch * out_p * xdt),
        )(*operands)

    if fc_arch == "B":
        return linear_call((x, w, b), apply_bn=False)[:, :out_dim]

    # ---------------- fc_arch 'A' ----------------
    # TODO(synk): BatchNorm1d running_mean/running_var buffer updates (training
    # side effect) are not maintained; only the training-mode forward output is.
    gamma = params["bn_gamma"]                   # (1, in_dim) f32
    beta = params["bn_beta"]                     # (1, in_dim) f32

    fused_need = (batch8 * in_lanes * (xdt + 12)       # x + f32 working copies
                  + w_bytes
                  + batch8 * out_p * (4 + xdt))        # f32 acc + out
    if (not _force_two_pass) and fused_need <= 28 * 1024 * 1024:
        # Fused path: x stays resident in VMEM (stats -> BN -> matmul).
        out_full = pl.pallas_call(
            _fused_bn_linear_kernel,
            out_shape=jax.ShapeDtypeStruct((batch, out_p), x.dtype),
            compiler_params=pltpu.CompilerParams(
                vmem_limit_bytes=vmem_limit(fused_need)),
        )(x, gamma, beta, w, b)
        return out_full[:, :out_dim]

    # Streaming two-pass fallback (large activations): pass 1 = batch stats.
    n_inner = _cdiv(n_bt, 2)

    def x_map(c, j):
        # Clamp so no DMA goes past the array; clamped (duplicate) tiles are
        # fully masked in-kernel via the unclamped row index.
        return (jnp.minimum(c * n_inner + j, n_bt - 1), 0)

    stats_need = 2 * tb * in_lanes * xdt + 4 * 8 * in_lanes * 4
    psum, psumsq = pl.pallas_call(
        functools.partial(_bn_stats_kernel, tb=tb, true_batch=batch,
                          n_inner=n_inner),
        out_shape=(jax.ShapeDtypeStruct((16, in_dim), jnp.float32),
                   jax.ShapeDtypeStruct((16, in_dim), jnp.float32)),
        grid=(2, n_inner),
        in_specs=[pl.BlockSpec((tb, in_dim), x_map)],
        out_specs=(pl.BlockSpec((8, in_dim), lambda c, j: (c, 0)),
                   pl.BlockSpec((8, in_dim), lambda c, j: (c, 0))),
        compiler_params=pltpu.CompilerParams(
            dimension_semantics=("parallel", "arbitrary"),
            vmem_limit_bytes=vmem_limit(stats_need)),
    )(x)

    n = jnp.float32(batch)
    mean = jnp.sum(psum, axis=0, keepdims=True) / n                 # (1, in_dim)
    # E[x^2]-E[x]^2 in f32 (clamped); the fused path above uses the more
    # accurate two-pass form for the common (VMEM-resident) case.
    var = jnp.maximum(jnp.sum(psumsq, axis=0, keepdims=True) / n - mean * mean,
                      0.0)
    scale = gamma * jax.lax.rsqrt(var + BN_EPS)                     # (1, in_dim)
    shift = beta - mean * scale                                     # (1, in_dim)

    # Pass 2: tiled matmul with in-kernel BN on the x tile.
    return linear_call((x, scale, shift, w, b), apply_bn=True)[:, :out_dim]


# --------------------------------------------------------------------------
# Params / reference
# --------------------------------------------------------------------------
def init_params(key, in_dim, out_dim, compute_dtype=jnp.float32):
    """nn.BatchNorm1d / nn.Linear-shaped params.

    The Linear weight is stored pre-transposed as (in_dim, out_p) with the
    output dim zero-padded to a multiple of 128 and pre-cast to the compute
    dtype, so the forward pass never touches the weight in XLA.
    """
    kw, kb = jax.random.split(key)
    out_p = _round_up(out_dim, 128)
    bound = in_dim ** -0.5
    weight = jax.random.uniform(kw, (out_dim, in_dim), jnp.float32, -bound, bound)
    bias = jax.random.uniform(kb, (out_dim,), jnp.float32, -bound, bound)
    weight_t = jnp.pad(weight.T, ((0, 0), (0, out_p - out_dim))).astype(compute_dtype)
    bias_p = jnp.pad(bias, (0, out_p - out_dim)).reshape(1, out_p).astype(jnp.float32)
    return {
        "bn_gamma": jnp.ones((1, in_dim), jnp.float32),
        "bn_beta": jnp.zeros((1, in_dim), jnp.float32),
        "weight_t": weight_t,       # (in_dim, out_p)
        "bias": bias_p,             # (1, out_p)
    }


def _reference(x, params, fc_arch, out_dim):
    w = params["weight_t"][:, :out_dim].astype(jnp.float32)
    b = params["bias"][0, :out_dim]
    if fc_arch == "A":
        mean = jnp.mean(x, axis=0, keepdims=True)
        var = jnp.mean((x - mean) ** 2, axis=0, keepdims=True)
        xh = (x - mean) / jnp.sqrt(var + BN_EPS)
        x = xh * params["bn_gamma"] + params["bn_beta"]
    return x @ w + b


if __name__ == "__main__":
    # Small, deliberately non-aligned shapes: exercises the padded-weight,
    # partial-batch-tile, fused and streaming paths.
    batch, in_dim, out_dim = 12, 40, 24
    key = jax.random.PRNGKey(0)
    kx, kp = jax.random.split(key)
    x = jax.random.normal(kx, (batch, in_dim), jnp.float32)
    params = init_params(kp, in_dim, out_dim)

    out_a = jax.block_until_ready(
        text_swem_forward(x, params, fc_arch="A", out_dim=out_dim))
    out_a2 = jax.block_until_ready(
        text_swem_forward(x, params, fc_arch="A", out_dim=out_dim,
                          _force_two_pass=True))
    out_b = jax.block_until_ready(
        text_swem_forward(x, params, fc_arch="B", out_dim=out_dim))

    ref_a = _reference(x, params, "A", out_dim)
    ref_b = _reference(x, params, "B", out_dim)
    assert out_a.shape == (batch, out_dim) and out_b.shape == (batch, out_dim)
    assert jnp.allclose(out_a, ref_a, atol=1e-4, rtol=1e-4)
    assert jnp.allclose(out_a2, ref_a, atol=1e-4, rtol=1e-4)
    assert jnp.allclose(out_b, ref_b, atol=1e-4, rtol=1e-4)

    print("KERNEL_OK")
</pallas_src>

<mosaic_0001>
module attributes {stable_mosaic.version = 11 : i64} {
  func.func @_fused_bn_linear_kernel(%arg0: memref<12x40xf32, #tpu.memory_space<vmem>>, %arg1: memref<1x40xf32, #tpu.memory_space<vmem>>, %arg2: memref<1x40xf32, #tpu.memory_space<vmem>>, %arg3: memref<40x128xf32, #tpu.memory_space<vmem>>, %arg4: memref<1x128xf32, #tpu.memory_space<vmem>>, %arg5: memref<12x128xf32, #tpu.memory_space<vmem>>) attributes {dimension_semantics = [], scalar_prefetch = 0 : i64, scratch_operands = 0 : i64, tpu.core_type = #tpu.core_type<tc>} {
    %c0 = arith.constant 0 : index
    %c0_0 = arith.constant 0 : index
    %0 = vector.load %arg0[%c0, %c0_0] : memref<12x40xf32, #tpu.memory_space<vmem>>, vector<12x40xf32>
    %cst = arith.constant dense<0.000000e+00> : vector<40xf32>
    %1 = vector.multi_reduction <add>, %0, %cst [0] : vector<12x40xf32> to vector<40xf32>
    %2 = vector.shape_cast %1 : vector<40xf32> to vector<1x40xf32>
    %cst_1 = arith.constant 1.200000e+01 : f32
    %3 = vector.broadcast %cst_1 : f32 to vector<1x40xf32>
    %4 = arith.divf %2, %3 : vector<1x40xf32>
    %5 = vector.broadcast %4 : vector<1x40xf32> to vector<12x40xf32>
    %6 = arith.subf %0, %5 : vector<12x40xf32>
    %7 = arith.mulf %6, %6 : vector<12x40xf32>
    %cst_2 = arith.constant dense<0.000000e+00> : vector<40xf32>
    %8 = vector.multi_reduction <add>, %7, %cst_2 [0] : vector<12x40xf32> to vector<40xf32>
    %9 = vector.shape_cast %8 : vector<40xf32> to vector<1x40xf32>
    %cst_3 = arith.constant 1.200000e+01 : f32
    %10 = vector.broadcast %cst_3 : f32 to vector<1x40xf32>
    %11 = arith.divf %9, %10 : vector<1x40xf32>
    %c0_4 = arith.constant 0 : index
    %c0_5 = arith.constant 0 : index
    %12 = vector.load %arg1[%c0_4, %c0_5] : memref<1x40xf32, #tpu.memory_space<vmem>>, vector<1x40xf32>
    %cst_6 = arith.constant 9.99999974E-6 : f32
    %13 = vector.broadcast %cst_6 : f32 to vector<1x40xf32>
    %14 = arith.addf %11, %13 : vector<1x40xf32>
    %15 = math.rsqrt %14 : vector<1x40xf32>
    %16 = arith.mulf %12, %15 : vector<1x40xf32>
    %17 = vector.broadcast %16 : vector<1x40xf32> to vector<12x40xf32>
    %18 = arith.mulf %6, %17 : vector<12x40xf32>
    %c0_7 = arith.constant 0 : index
    %c0_8 = arith.constant 0 : index
    %19 = vector.load %arg2[%c0_7, %c0_8] : memref<1x40xf32, #tpu.memory_space<vmem>>, vector<1x40xf32>
    %20 = vector.broadcast %19 : vector<1x40xf32> to vector<12x40xf32>
    %21 = arith.addf %18, %20 : vector<12x40xf32>
    %c0_9 = arith.constant 0 : index
    %c0_10 = arith.constant 0 : index
    %22 = vector.load %arg3[%c0_9, %c0_10] : memref<40x128xf32, #tpu.memory_space<vmem>>, vector<40x128xf32>
    %cst_11 = arith.constant dense<0.000000e+00> : vector<12x128xf32>
    %23 = tpu.matmul %21, %22, %cst_11 {dimension_numbers = #tpu.dot_dimension_numbers<[1], [0], [0], [1], [0, 0, 1, 1], [], []>} : vector<12x40xf32>, vector<40x128xf32>, vector<12x128xf32> -> vector<12x128xf32>
    %c0_12 = arith.constant 0 : index
    %c0_13 = arith.constant 0 : index
    %24 = vector.load %arg4[%c0_12, %c0_13] : memref<1x128xf32, #tpu.memory_space<vmem>>, vector<1x128xf32>
    %25 = vector.broadcast %24 : vector<1x128xf32> to vector<12x128xf32>
    %26 = arith.addf %23, %25 : vector<12x128xf32>
    %c0_14 = arith.constant 0 : index
    %c0_15 = arith.constant 0 : index
    %27 = vector.load %arg5[%c0_14, %c0_15] : memref<12x128xf32, #tpu.memory_space<vmem>>, vector<12x128xf32>
    tpu.vector_store %arg5[%c0_14, %c0_15], %26 {strides = array<i32>} : memref<12x128xf32, #tpu.memory_space<vmem>>, vector<12x128xf32>,
    return
  }
}

</mosaic_0001>

<llo_original>
// kernel: text_swem_forward.1
$region0: #{text_swem_forward.1}
  #allocation0 [shape = 'u32[]', space=smem, size = 0x4, offset = 0x4, fixed_abs, tag = 'smem constant byte address 0x4 - core index']
  #allocation1 [shape = 'u32[144,128]{1,0:T(1,128)}', space=vmem, size = 0x12000, scoped, tag = 'internal scratch']
  %s0 = inlined_call_operand.hbm [shape: f32[12,40], index: 0, kind: input, shape index: {}]
  %s1 = inlined_call_operand.vmem [shape: f32[1,40], index: 1, kind: input, shape index: {}]
  %s2 = inlined_call_operand.vmem [shape: f32[1,40], index: 2, kind: input, shape index: {}]
  %s3 = inlined_call_operand.hbm [shape: f32[40,128], index: 3, kind: input, shape index: {}]
  %s4 = inlined_call_operand.vmem [shape: f32[1,128], index: 4, kind: input, shape index: {}]
  %s5 = inlined_call_operand.hbm [shape: f32[12,128], index: 5, kind: output, shape index: {}]
  %s6 = sld [smem:[#allocation0]]
  $region38: #{text_swem_forward.1} parent=0
    _
  %s8 = ssub.s32 1, %s6
  %s9 = scalar_select 0, %s8, %s6
  $region1: #{text_swem_forward.1} parent=0
    #allocation2 [shape = 'u8[8192]{0}', space=vmem, size = 0x2000, scoped, tag = 'input window, operand 0, single buffered']
    #allocation3 [shape = 's32[1]{0}', space=sflag, size = 0x4, scoped, tag = 'scoped memory for text_swem_forward.1']
    #allocation4 [shape = 's32[1]{0}', space=sflag, size = 0x4, scoped, tag = 'scoped memory for text_swem_forward.1']
    #allocation5 [shape = 'u8[20480]{0}', space=vmem, size = 0x5000, scoped, tag = 'input window, operand 3, single buffered']
    #allocation6 [shape = 's32[1]{0}', space=sflag, size = 0x4, scoped, tag = 'scoped memory for text_swem_forward.1']
    #allocation7 [shape = 'u8[8192]{0}', space=vmem, size = 0x2000, scoped, tag = 'output window, operand 0, single buffered']
    %10 = vsyncpa [#allocation3], 0
    %11 = vsyncpa [#allocation6], 0
    %12 = vsyncpa [#allocation4], 0
    // Predicated region
    $region2: #{text_swem_forward.1} parent=1 // pred_check
      _
    $region3: #{text_swem_forward.1} parent=1 // pred_check_branch
      %14 = sbr.rel (0) target = $region5
    $region4: #{text_swem_forward.1} parent=1 // pred_region
      %s16 = ssub.s32 256, 256
      %17 = vsyncadd [#allocation3], %s16
      %s18 = sshll.u32 [#allocation2], 4
      %s19 = int_to_ptr.vmem [resolvable:$true] %s18
      %24 = dma.hbm_to_vmem [thread:$0]  %s0, 256, %s19, [#allocation3], 128, 128, 8
    $region5: #{text_swem_forward.1} parent=1 // pred_fallthru
      _
    // Predicated region
    $region6: #{text_swem_forward.1} parent=1 // pred_check
      _
    $region7: #{text_swem_forward.1} parent=1 // pred_check_branch
      %26 = sbr.rel (0) target = $region9
    $region8: #{text_swem_forward.1} parent=1 // pred_region
      _
    $region9: #{text_swem_forward.1} parent=1 // pred_fallthru
      _
    // Predicated region
    $region10: #{text_swem_forward.1} parent=1 // pred_check
      _
    $region11: #{text_swem_forward.1} parent=1 // pred_check_branch
      %28 = sbr.rel (0) target = $region13
    $region12: #{text_swem_forward.1} parent=1 // pred_region
      _
    $region13: #{text_swem_forward.1} parent=1 // pred_fallthru
      _
    // Predicated region
    $region14: #{text_swem_forward.1} parent=1 // pred_check
      _
    $region15: #{text_swem_forward.1} parent=1 // pred_check_branch
      %30 = sbr.rel (0) target = $region17
    $region16: #{text_swem_forward.1} parent=1 // pred_region
      %s32 = ssub.s32 640, 640
      %33 = vsyncadd [#allocation6], %s32
      %s34 = sshll.u32 [#allocation5], 4
      %s35 = int_to_ptr.vmem [resolvable:$true] %s34
      %40 = dma.hbm_to_vmem [thread:$0]  %s3, 640, %s35, [#allocation6], 128, 128, 8
    $region17: #{text_swem_forward.1} parent=1 // pred_fallthru
      _
    // Predicated region
    $region18: #{text_swem_forward.1} parent=1 // pred_check
      _
    $region19: #{text_swem_forward.1} parent=1 // pred_check_branch
      %42 = sbr.rel (0) target = $region21
    $region20: #{text_swem_forward.1} parent=1 // pred_region
      _
    $region21: #{text_swem_forward.1} parent=1 // pred_fallthru
      _
    // Predicated region
    $region22: #{text_swem_forward.1} parent=1 // pred_check
      _
    $region23: #{text_swem_forward.1} parent=1 // pred_check_branch
      %44 = sbr.rel (0) target = $region25
    $region24: #{text_swem_forward.1} parent=1 // pred_region
      %45 = dma.done [#allocation3], 256
    $region25: #{text_swem_forward.1} parent=1 // pred_fallthru
      _
    // Predicated region
    $region26: #{text_swem_forward.1} parent=1 // pred_check
      _
    $region27: #{text_swem_forward.1} parent=1 // pred_check_branch
      %47 = sbr.rel (0) target = $region29
    $region28: #{text_swem_forward.1} parent=1 // pred_region
      %48 = dma.done [#allocation6], 640
    $region29: #{text_swem_forward.1} parent=1 // pred_fallthru
      _
    %v49 = vld [vmem:[#allocation2] sm:$0xff]
    %v50 = vld [vmem:[#allocation2 + $0x8] sm:$0xf]
    %vm51 = vcmask 326656
    %v52 = vsel %vm51, %v49, 0.0
    %vm53 = vcmask 322560
    %v54 = vsel %vm53, %v50, 0.0
    %v55 = vadd.f32 %v52, %v54
    %v56 = vrot.slane %v55, 4
    %v57 = vadd.f32 %v55, %v56
    %v58 = vrot.slane %v57, 2
    %v59 = vadd.f32 %v57, %v58
    %v60 = vrot.slane %v59, 1
    %v61 = vadd.f32 %v59, %v60
    %v62 = vrcp.pop 12.0
    %v63 = vmul.f32 %v61, %v62
    %v64 = vsub.f32 %v49, %v63
    %v65 = vsub.f32 %v50, %v63
    %v66 = vmul.f32 %v64, %v64
    %v67 = vmul.f32 %v65, %v65
    %v68 = vsel %vm51, %v66, 0.0
    %v69 = vsel %vm53, %v67, 0.0
    %v70 = vadd.f32 %v68, %v69
    %v71 = vrot.slane %v70, 4
    %v72 = vadd.f32 %v70, %v71
    %v73 = vrot.slane %v72, 2
    %v74 = vadd.f32 %v72, %v73
    %v75 = vrot.slane %v74, 1
    %v76 = vadd.f32 %v74, %v75
    %v77 = vmul.f32 %v76, %v62
    %v78 = vld [vmem:[%s1] sm:$0x1]
    %v79 = vadd.f32 %v77, 1e-05
    %v80 = vrsqrt.pop %v79
    %v81 = vmul.f32 %v78, %v80
    %v83 = vlaneseq
    %v84 = vshrl.u32 %v83, 7
    %v85 = vsub.s32 0, %v84
    %v86 = vrot.slane %v81, %v85
    %v88 = vmul.f32 %v64, %v86
    %v89 = vmul.f32 %v65, %v86
    %v90 = vld [vmem:[%s2] sm:$0x1]
    %v92 = vlaneseq
    %v93 = vshrl.u32 %v92, 7
    %v94 = vsub.s32 0, %v93
    %v95 = vrot.slane %v90, %v94
    %v97 = vadd.f32 %v88, %v95
    %v98 = vadd.f32 %v89, %v95
    %v99 = vld [vmem:[#allocation5] sm:$0xff]
    %v100 = vld [vmem:[#allocation5 + $0x8] sm:$0xff]
    %v101 = vld [vmem:[#allocation5 + $0x10] sm:$0xff]
    %v102 = vld [vmem:[#allocation5 + $0x18] sm:$0xff]
    %v103 = vld [vmem:[#allocation5 + $0x20] sm:$0xff]
    %v104 = vld [vmem:[%s4] sm:$0x1]
    %v106 = vlaneseq
    %v107 = vshrl.u32 %v106, 7
    %v108 = vsub.s32 0, %v107
    %v109 = vrot.slane %v104, %v108
    %v112 = vsel %vm51, %v97, 0
    %v115 = vsel %vm51, %v98, 0
    %117 = vmatprep.subr.mxu0 0.0
    %118 = vmatpush1.msra.mxu0 %v99
    %119 = vmatprep.subr.mxu0 0.0
    %120 = vmatpush1.msra.mxu0 %v100
    %121 = vmatprep.subr.mxu0 0.0
    %122 = vmatpush1.msra.mxu0 %v101
    %123 = vmatprep.subr.mxu0 0.0
    %124 = vmatpush1.msra.mxu0 %v102
    %125 = vmatprep.subr.mxu0 0.0
    %126 = vmatpush1.msra.mxu0 %v103
    %127 = vmatprep.subr.mxu0 0.0
    %128 = vmatpush1.msra.mxu0 0.0
    %129 = vmatprep.subr.mxu0 0.0
    %130 = vmatpush1.msra.mxu0 0.0
    %131 = vmatprep.subr.mxu0 0.0
    %132 = vmatpush1.msra.mxu0 0.0
    %133 = vmatprep.subr.mxu0 0.0
    %134 = vmatpush1.msra.mxu0 0.0
    %135 = vmatprep.subr.mxu0 0.0
    %136 = vmatpush1.msra.mxu0 0.0
    %137 = vmatprep.subr.mxu0 0.0
    %138 = vmatpush1.msra.mxu0 0.0
    %139 = vmatprep.subr.mxu0 0.0
    %140 = vmatpush1.msra.mxu0 0.0
    %141 = vmatprep.subr.mxu0 0.0
    %142 = vmatpush1.msra.mxu0 0.0
    %143 = vmatprep.subr.mxu0 0.0
    %144 = vmatpush1.msra.mxu0 0.0
    %145 = vmatprep.subr.mxu0 0.0
    %146 = vmatpush1.msra.mxu0 0.0
    %147 = vmatprep.subr.mxu0 0.0
    %148 = vmatpush1.msra.mxu0 0.0
    %149 = vmatprep.subr.mxu0 0.0
    %150 = vmatpush1.msra.mxu0 0.0
    %151 = vmatprep.subr.mxu0 0.0
    %152 = vmatpush1.msra.mxu0 0.0
    %153 = vmatprep.subr.mxu0 0.0
    %154 = vmatpush1.msra.mxu0 0.0
    %155 = vmatprep.subr.mxu0 0.0
    %156 = vmatpush1.msra.mxu0 0.0
    %157 = vmatprep.subr.mxu0 0.0
    %158 = vmatpush1.msra.mxu0 0.0
    %159 = vmatprep.subr.mxu0 0.0
    %160 = vmatpush1.msra.mxu0 0.0
    %161 = vmatprep.subr.mxu0 0.0
    %162 = vmatpush1.msra.mxu0 0.0
    %163 = vmatprep.subr.mxu0 0.0
    %164 = vmatpush1.msra.mxu0 0.0
    %165 = vmatprep.subr.mxu0 0.0
    %166 = vmatpush1.msra.mxu0 0.0
    %167 = vmatprep.subr.mxu0 0.0
    %168 = vmatpush1.msra.mxu0 0.0
    %169 = vmatprep.subr.mxu0 0.0
    %170 = vmatpush1.msra.mxu0 0.0
    %171 = vmatprep.subr.mxu0 0.0
    %172 = vmatpush1.msra.mxu0 0.0
    %173 = vmatprep.subr.mxu0 0.0
    %174 = vmatpush1.msra.mxu0 0.0
    %175 = vmatprep.subr.mxu0 0.0
    %176 = vmatpush1.msra.mxu0 0.0
    %177 = vmatprep.subr.mxu0 0.0
    %178 = vmatpush1.msra.mxu0 0.0
    %179 = vmatprep.subr.mxu0 0.0
    %180 = vmatpush1.msra.mxu0 0.0
    %181 = vmatprep.mubr.f32.mxu0 0.0
    %182 = vmatmul.mubr.f32.gmra.mrb[0].mxu0 %v112
    %v183 = vpop.f32.mrb[0].mxu0
    %v184 = vadd.f32 %v109, %v183
    %v185 = vpop.f32.mrb[0].mxu0
    %186 = vmatprep.mubr.f32.mxu0 0.0
    %187 = vmatmul.mubr.f32.gmra.mrb[0].mxu0 %v115
    %v188 = vpop.f32.mrb[0].mxu0
    %v189 = vadd.f32 %v109, %v188
    %v190 = vpop.f32.mrb[0].mxu0
    %191 = vdwg.mxu0
    %192 = vst [vmem:[#allocation7] sm:$0xff] %v184
    %193 = vst [vmem:[#allocation7 + $0x8] sm:$0xf] %v189
    // Predicated region
    $region30: #{text_swem_forward.1} parent=1 // pred_check
      _
    $region31: #{text_swem_forward.1} parent=1 // pred_check_branch
      %195 = sbr.rel (0) target = $region33
    $region32: #{text_swem_forward.1} parent=1 // pred_region
      %s197 = ssub.s32 256, 256
      %198 = vsyncadd [#allocation4], %s197
      %s199 = sshll.u32 [#allocation7], 4
      %s200 = int_to_ptr.vmem [resolvable:$true] %s199
      %205 = dma.vmem_to_hbm [thread:$0]  %s200, 256, %s5, [#allocation4], 128, 128, 8
    $region33: #{text_swem_forward.1} parent=1 // pred_fallthru
      _
    // Predicated region
    $region34: #{text_swem_forward.1} parent=1 // pred_check
      _
    $region35: #{text_swem_forward.1} parent=1 // pred_check_branch
      %207 = sbr.rel (0) target = $region37
    $region36: #{text_swem_forward.1} parent=1 // pred_region
      %208 = dma.done [#allocation4], 256
    $region37: #{text_swem_forward.1} parent=1 // pred_fallthru
      _
    %209 = vsyncpa [#allocation3], 1
    %210 = vsyncpa [#allocation6], 1
    %211 = vsyncpa [#allocation4], 1

</llo_original>
